<compile_context>
chip_gen: v7x
topology: tpu7x:2x2x1
jax: 0.10.0
libtpu: 0.0.40
codegen_flags: <defaults>
</compile_context>

<pallas_src>
import jax
import jax.numpy as jnp
from jax.experimental import pallas as pl
from jax.experimental.pallas import tpu as pltpu

HIDDEN = 300      # logical hidden size of the PyTorch module
H_PAD = 384       # hidden padded to a multiple of 128 (zero padding -> exact math)
OUT_LANES = 128   # lane-dense output block; the real Q value is read from lane 0


def _round_up(n, m):
    return ((n + m - 1) // m) * m


def critic_kernel(xu_ref, w1_ref, b1_ref, w2_ref, b2_ref, w3_ref, b3_ref, out_ref):
    """One grid step = one Q branch x one batch block."""
    xu = xu_ref[...].astype(jnp.bfloat16)                       # [bb, in_pad]

    # Layer 1 (fused cat(x,g,u) @ W1 + b1, ReLU)
    h = jnp.dot(xu, w1_ref[...], preferred_element_type=jnp.float32) + b1_ref[...]
    h = jnp.maximum(h, 0.0)

    # Layer 2 (W2 @ . + b2, ReLU)
    h = jnp.dot(h.astype(jnp.bfloat16), w2_ref[...],
                preferred_element_type=jnp.float32) + b2_ref[...]
    h = jnp.maximum(h, 0.0)                                     # [bb, H_PAD] f32

    # Layer 3: output dim is 1, so do a VPU multiply + XLU lane reduction
    # instead of an MXU matmul against a 127/128-zero matrix.
    w3 = w3_ref[...].astype(jnp.float32)                        # [1, H_PAD]
    q = jnp.sum(h * w3, axis=-1, keepdims=True) + b3_ref[...]   # [bb, 1]

    # Lane-dense (unmasked) store; wrapper reads lane 0 only.
    out_ref[...] = jnp.broadcast_to(q, out_ref.shape)


def critic_forward(x, g, u, packed, batch_block=256):
    """x: [B, state_dim], g: [B, goal_dim], u: [B, action_dim] -> (Q1, Q2), each [B, 1]."""
    w1s, b1s, w2s, b2s, w3s, b3s = packed
    in_pad = w1s.shape[1]
    h_pad = w1s.shape[2]
    B = x.shape[0]

    # Fuse torch.cat([x, g, u], 1) + zero-pad features to the packed W1 rows.
    xu = jnp.concatenate([x, g, u], axis=1)
    d = xu.shape[1]
    if d < in_pad:
        xu = jnp.pad(xu, ((0, 0), (0, in_pad - d)))

    # Batch blocking (weights stay resident across batch blocks).
    bb = B if B <= batch_block else batch_block
    b_pad = _round_up(B, bb)
    if b_pad != B:
        xu = jnp.pad(xu, ((0, b_pad - B), (0, 0)))
    nb = b_pad // bb

    ins = (xu, w1s, b1s, w2s, b2s, w3s, b3s)
    out_size = 2 * b_pad * OUT_LANES
    flops = 2 * (2 * b_pad * (in_pad * h_pad + h_pad * h_pad) + 2 * b_pad * h_pad)
    bytes_accessed = (sum(int(a.size) * a.dtype.itemsize for a in ins) + out_size * 4)

    out = pl.pallas_call(
        critic_kernel,
        out_shape=jax.ShapeDtypeStruct((2, b_pad, OUT_LANES), jnp.float32),
        grid_spec=pltpu.PrefetchScalarGridSpec(
            num_scalar_prefetch=0,
            grid=(2, nb),                                # (branch, batch block)
            in_specs=[
                pl.BlockSpec((bb, in_pad), lambda i, bi: (bi, 0)),          # xu
                pl.BlockSpec((None, in_pad, h_pad), lambda i, bi: (i, 0, 0)),  # W1
                pl.BlockSpec((None, 1, h_pad), lambda i, bi: (i, 0, 0)),       # b1
                pl.BlockSpec((None, h_pad, h_pad), lambda i, bi: (i, 0, 0)),   # W2
                pl.BlockSpec((None, 1, h_pad), lambda i, bi: (i, 0, 0)),       # b2
                pl.BlockSpec((None, 1, h_pad), lambda i, bi: (i, 0, 0)),       # W3 row
                pl.BlockSpec((None, 1, 1), lambda i, bi: (i, 0, 0)),           # b3
            ],
            out_specs=pl.BlockSpec((None, bb, OUT_LANES), lambda i, bi: (i, bi, 0)),
        ),
        compiler_params=pltpu.CompilerParams(
            dimension_semantics=("parallel", "arbitrary")),
        cost_estimate=pl.CostEstimate(flops=flops, transcendentals=0,
                                      bytes_accessed=bytes_accessed),
    )(*ins)

    q1 = out[0, :B, :1]
    q2 = out[1, :B, :1]
    return q1, q2


def init_critic_params(key, state_dim, goal_dim, action_dim, hidden=HIDDEN):
    """Deterministic synthetic parameters (PyTorch Linear init, transposed layout)."""
    in_dim = state_dim + goal_dim + action_dim
    ks = jax.random.split(key, 12)

    def lin(kw, kb, fan_in, fan_out):
        bound = 1.0 / float(fan_in) ** 0.5
        w = jax.random.uniform(kw, (fan_in, fan_out), jnp.float32, -bound, bound)
        b = jax.random.uniform(kb, (1, fan_out), jnp.float32, -bound, bound)
        return w, b

    w1, b1 = lin(ks[0], ks[1], in_dim, hidden)
    w2, b2 = lin(ks[2], ks[3], hidden, hidden)
    w3, b3 = lin(ks[4], ks[5], hidden, 1)
    w4, b4 = lin(ks[6], ks[7], in_dim, hidden)
    w5, b5 = lin(ks[8], ks[9], hidden, hidden)
    w6, b6 = lin(ks[10], ks[11], hidden, 1)
    return (w1, b1, w2, b2, w3, b3, w4, b4, w5, b5, w6, b6)


def pack_kernel_params(raw):
    """Pad to 128-aligned lanes, cast weights to bf16, stack the two Q branches
    on a leading axis of size 2 (grid branch axis)."""
    (w1, b1, w2, b2, w3, b3, w4, b4, w5, b5, w6, b6) = raw
    in_dim = w1.shape[0]
    in_pad = _round_up(in_dim, 32)  # bf16 sublane-pack multiple

    def pad2(a, rows, cols):
        return jnp.zeros((rows, cols), a.dtype).at[:a.shape[0], :a.shape[1]].set(a)

    def branch(W1, B1, W2, B2, W3, B3):
        w1p = pad2(W1, in_pad, H_PAD).astype(jnp.bfloat16)
        b1p = pad2(B1, 1, H_PAD)                                  # f32
        w2p = pad2(W2, H_PAD, H_PAD).astype(jnp.bfloat16)
        b2p = pad2(B2, 1, H_PAD)                                  # f32
        w3row = pad2(W3.T, 1, H_PAD).astype(jnp.bfloat16)         # [1, H_PAD]
        b3p = B3.reshape(1, 1)                                    # f32 scalar
        return w1p, b1p, w2p, b2p, w3row, b3p

    a = branch(w1, b1, w2, b2, w3, b3)
    b = branch(w4, b4, w5, b5, w6, b6)
    return tuple(jnp.stack([pa, pb], axis=0) for pa, pb in zip(a, b))


def critic_reference(x, g, u, raw):
    """Pure-JAX reference mirroring the kernel's bf16 weight storage / f32 accum."""
    (w1, b1, w2, b2, w3, b3, w4, b4, w5, b5, w6, b6) = raw
    bq = lambda a: a.astype(jnp.bfloat16).astype(jnp.float32)
    xu = jnp.concatenate([x, g, u], axis=1)

    def branch(W1, B1, W2, B2, W3, B3):
        h = jax.nn.relu(bq(xu) @ bq(W1) + B1)
        h = jax.nn.relu(bq(h) @ bq(W2) + B2)
        return h @ bq(W3) + B3        # final layer: f32 activations x bf16 weights

    return branch(w1, b1, w2, b2, w3, b3), branch(w4, b4, w5, b5, w6, b6)


if __name__ == "__main__":
    state_dim, goal_dim, action_dim = 16, 8, 4
    batch = 2

    key = jax.random.PRNGKey(0)
    kx, kg, ku, kp = jax.random.split(key, 4)
    x = jax.random.normal(kx, (batch, state_dim), jnp.float32)
    g = jax.random.normal(kg, (batch, goal_dim), jnp.float32)
    u = jax.random.normal(ku, (batch, action_dim), jnp.float32)

    raw_params = init_critic_params(kp, state_dim, goal_dim, action_dim)
    kernel_params = pack_kernel_params(raw_params)

    q1, q2 = critic_forward(x, g, u, kernel_params)
    q1, q2 = jax.block_until_ready((q1, q2))

    r1, r2 = critic_reference(x, g, u, raw_params)
    assert q1.shape == (batch, 1) and q2.shape == (batch, 1)
    assert jnp.allclose(q1, r1, atol=2e-3, rtol=2e-3), "Q1 mismatch vs reference"
    assert jnp.allclose(q2, r2, atol=2e-3, rtol=2e-3), "Q2 mismatch vs reference"

    print("KERNEL_OK")
</pallas_src>

<mosaic_0001>
module attributes {stable_mosaic.version = 11 : i64} {
  func.func @critic_kernel(%arg0: i32, %arg1: i32, %arg2: memref<2x32xf32, #tpu.memory_space<vmem>>, %arg3: memref<1x32x384xbf16, #tpu.memory_space<vmem>>, %arg4: memref<1x1x384xf32, #tpu.memory_space<vmem>>, %arg5: memref<1x384x384xbf16, #tpu.memory_space<vmem>>, %arg6: memref<1x1x384xf32, #tpu.memory_space<vmem>>, %arg7: memref<1x1x384xbf16, #tpu.memory_space<vmem>>, %arg8: memref<1x1x1xf32, #tpu.memory_space<vmem>>, %arg9: memref<1x2x128xf32, #tpu.memory_space<vmem>>) attributes {dimension_semantics = [#tpu.dimension_semantics<parallel>, #tpu.dimension_semantics<arbitrary>], iteration_bounds = array<i64: 2, 1>, scalar_prefetch = 0 : i64, scratch_operands = 0 : i64, tpu.core_type = #tpu.core_type<tc>, window_params = [{transform_indices = @transform_0, window_bounds = array<i64: 2, 32>}, {transform_indices = @transform_1, window_bounds = array<i64: 1, 32, 384>}, {transform_indices = @transform_2, window_bounds = array<i64: 1, 1, 384>}, {transform_indices = @transform_3, window_bounds = array<i64: 1, 384, 384>}, {transform_indices = @transform_4, window_bounds = array<i64: 1, 1, 384>}, {transform_indices = @transform_5, window_bounds = array<i64: 1, 1, 384>}, {transform_indices = @transform_6, window_bounds = array<i64: 1, 1, 1>}, {transform_indices = @transform_7, window_bounds = array<i64: 1, 2, 128>}]} {
    %c0 = arith.constant 0 : index
    %c0_0 = arith.constant 0 : index
    %0 = vector.load %arg2[%c0, %c0_0] : memref<2x32xf32, #tpu.memory_space<vmem>>, vector<2x32xf32>
    %1 = arith.truncf %0 : vector<2x32xf32> to vector<2x32xbf16>
    %c0_1 = arith.constant 0 : index
    %c0_2 = arith.constant 0 : index
    %c0_3 = arith.constant 0 : index
    %2 = vector.load %arg3[%c0_1, %c0_2, %c0_3] : memref<1x32x384xbf16, #tpu.memory_space<vmem>>, vector<1x32x384xbf16>
    %3 = vector.shape_cast %2 : vector<1x32x384xbf16> to vector<32x384xbf16>
    %cst = arith.constant dense<0.000000e+00> : vector<2x384xf32>
    %4 = tpu.matmul %1, %3, %cst {dimension_numbers = #tpu.dot_dimension_numbers<[1], [0], [0], [1], [0, 0, 1, 1], [], []>} : vector<2x32xbf16>, vector<32x384xbf16>, vector<2x384xf32> -> vector<2x384xf32>
    %c0_4 = arith.constant 0 : index
    %c0_5 = arith.constant 0 : index
    %c0_6 = arith.constant 0 : index
    %5 = vector.load %arg4[%c0_4, %c0_5, %c0_6] : memref<1x1x384xf32, #tpu.memory_space<vmem>>, vector<1x1x384xf32>
    %6 = vector.shape_cast %5 : vector<1x1x384xf32> to vector<1x384xf32>
    %7 = vector.broadcast %6 : vector<1x384xf32> to vector<2x384xf32>
    %8 = arith.addf %4, %7 : vector<2x384xf32>
    %cst_7 = arith.constant 0.000000e+00 : f32
    %9 = vector.broadcast %cst_7 : f32 to vector<2x384xf32>
    %10 = arith.maximumf %8, %9 : vector<2x384xf32>
    %11 = arith.truncf %10 : vector<2x384xf32> to vector<2x384xbf16>
    %c0_8 = arith.constant 0 : index
    %c0_9 = arith.constant 0 : index
    %c0_10 = arith.constant 0 : index
    %12 = vector.load %arg5[%c0_8, %c0_9, %c0_10] : memref<1x384x384xbf16, #tpu.memory_space<vmem>>, vector<1x384x384xbf16>
    %13 = vector.shape_cast %12 : vector<1x384x384xbf16> to vector<384x384xbf16>
    %cst_11 = arith.constant dense<0.000000e+00> : vector<2x384xf32>
    %14 = tpu.matmul %11, %13, %cst_11 {dimension_numbers = #tpu.dot_dimension_numbers<[1], [0], [0], [1], [0, 0, 1, 1], [], []>} : vector<2x384xbf16>, vector<384x384xbf16>, vector<2x384xf32> -> vector<2x384xf32>
    %c0_12 = arith.constant 0 : index
    %c0_13 = arith.constant 0 : index
    %c0_14 = arith.constant 0 : index
    %15 = vector.load %arg6[%c0_12, %c0_13, %c0_14] : memref<1x1x384xf32, #tpu.memory_space<vmem>>, vector<1x1x384xf32>
    %16 = vector.shape_cast %15 : vector<1x1x384xf32> to vector<1x384xf32>
    %17 = vector.broadcast %16 : vector<1x384xf32> to vector<2x384xf32>
    %18 = arith.addf %14, %17 : vector<2x384xf32>
    %cst_15 = arith.constant 0.000000e+00 : f32
    %19 = vector.broadcast %cst_15 : f32 to vector<2x384xf32>
    %20 = arith.maximumf %18, %19 : vector<2x384xf32>
    %c0_16 = arith.constant 0 : index
    %c0_17 = arith.constant 0 : index
    %c0_18 = arith.constant 0 : index
    %21 = vector.load %arg7[%c0_16, %c0_17, %c0_18] : memref<1x1x384xbf16, #tpu.memory_space<vmem>>, vector<1x1x384xbf16>
    %22 = vector.shape_cast %21 : vector<1x1x384xbf16> to vector<1x384xbf16>
    %23 = arith.extf %22 : vector<1x384xbf16> to vector<1x384xf32>
    %24 = vector.broadcast %23 : vector<1x384xf32> to vector<2x384xf32>
    %25 = arith.mulf %20, %24 : vector<2x384xf32>
    %cst_19 = arith.constant dense<0.000000e+00> : vector<2xf32>
    %26 = vector.multi_reduction <add>, %25, %cst_19 [1] : vector<2x384xf32> to vector<2xf32>
    %27 = vector.shape_cast %26 : vector<2xf32> to vector<2x1xf32>
    %c0_20 = arith.constant 0 : index
    %c0_21 = arith.constant 0 : index
    %c0_22 = arith.constant 0 : index
    %28 = vector.load %arg8[%c0_20, %c0_21, %c0_22] : memref<1x1x1xf32, #tpu.memory_space<vmem>>, vector<1x1x1xf32>
    %29 = vector.shape_cast %28 : vector<1x1x1xf32> to vector<1x1xf32>
    %30 = vector.broadcast %29 : vector<1x1xf32> to vector<2x1xf32>
    %31 = arith.addf %27, %30 : vector<2x1xf32>
    %32 = vector.shape_cast %31 : vector<2x1xf32> to vector<2x1xf32>
    %33 = vector.broadcast %32 : vector<2x1xf32> to vector<2x128xf32>
    %c0_23 = arith.constant 0 : index
    %c0_24 = arith.constant 0 : index
    %c0_25 = arith.constant 0 : index
    %34 = vector.load %arg9[%c0_23, %c0_24, %c0_25] : memref<1x2x128xf32, #tpu.memory_space<vmem>>, vector<1x2x128xf32>
    %35 = vector.shape_cast %34 : vector<1x2x128xf32> to vector<2x128xf32>
    %36 = vector.shape_cast %33 : vector<2x128xf32> to vector<1x2x128xf32>
    tpu.vector_store %arg9[%c0_23, %c0_24, %c0_25], %36 {strides = array<i32>} : memref<1x2x128xf32, #tpu.memory_space<vmem>>, vector<1x2x128xf32>,
    return
  }
  func.func @transform_0(%arg0: i32, %arg1: i32) -> (i32, i32) {
    %c0_i32 = arith.constant 0 : i32
    %c0_i32_0 = arith.constant 0 : i32
    return %arg1, %c0_i32 : i32, i32
  }
  func.func @transform_1(%arg0: i32, %arg1: i32) -> (i32, i32, i32) {
    %c0_i32 = arith.constant 0 : i32
    %c0_i32_0 = arith.constant 0 : i32
    %c0_i32_1 = arith.constant 0 : i32
    return %arg0, %c0_i32, %c0_i32_0 : i32, i32, i32
  }
  func.func @transform_2(%arg0: i32, %arg1: i32) -> (i32, i32, i32) {
    %c0_i32 = arith.constant 0 : i32
    %c0_i32_0 = arith.constant 0 : i32
    %c0_i32_1 = arith.constant 0 : i32
    return %arg0, %c0_i32, %c0_i32_0 : i32, i32, i32
  }
  func.func @transform_3(%arg0: i32, %arg1: i32) -> (i32, i32, i32) {
    %c0_i32 = arith.constant 0 : i32
    %c0_i32_0 = arith.constant 0 : i32
    %c0_i32_1 = arith.constant 0 : i32
    return %arg0, %c0_i32, %c0_i32_0 : i32, i32, i32
  }
  func.func @transform_4(%arg0: i32, %arg1: i32) -> (i32, i32, i32) {
    %c0_i32 = arith.constant 0 : i32
    %c0_i32_0 = arith.constant 0 : i32
    %c0_i32_1 = arith.constant 0 : i32
    return %arg0, %c0_i32, %c0_i32_0 : i32, i32, i32
  }
  func.func @transform_5(%arg0: i32, %arg1: i32) -> (i32, i32, i32) {
    %c0_i32 = arith.constant 0 : i32
    %c0_i32_0 = arith.constant 0 : i32
    %c0_i32_1 = arith.constant 0 : i32
    return %arg0, %c0_i32, %c0_i32_0 : i32, i32, i32
  }
  func.func @transform_6(%arg0: i32, %arg1: i32) -> (i32, i32, i32) {
    %c0_i32 = arith.constant 0 : i32
    %c0_i32_0 = arith.constant 0 : i32
    %c0_i32_1 = arith.constant 0 : i32
    return %arg0, %c0_i32, %c0_i32_0 : i32, i32, i32
  }
  func.func @transform_7(%arg0: i32, %arg1: i32) -> (i32, i32, i32) {
    %c0_i32 = arith.constant 0 : i32
    %c0_i32_0 = arith.constant 0 : i32
    return %arg0, %arg1, %c0_i32 : i32, i32, i32
  }
}

</mosaic_0001>

<llo_original>
// kernel: tpu_custom_call.1
$region0: #{tpu_custom_call.1}
  #allocation0 [shape = 'u32[]', space=smem, size = 0x4, offset = 0x4, fixed_abs, tag = 'smem constant byte address 0x4 - core index']
  #allocation1 [shape = 'u32[144,128]{1,0:T(1,128)}', space=vmem, size = 0x12000, scoped, tag = 'internal scratch']
  %s0 = inlined_call_operand.hbm [shape: f32[2,32], index: 0, kind: input, shape index: {}]
  %s1 = inlined_call_operand.hbm [shape: bf16[2,32,384], index: 1, kind: input, shape index: {}]
  %s2 = inlined_call_operand.vmem [shape: f32[2,1,384], index: 2, kind: input, shape index: {}]
  %s3 = inlined_call_operand.hbm [shape: bf16[2,384,384], index: 3, kind: input, shape index: {}]
  %s4 = inlined_call_operand.vmem [shape: f32[2,1,384], index: 4, kind: input, shape index: {}]
  %s5 = inlined_call_operand.vmem [shape: bf16[2,1,384], index: 5, kind: input, shape index: {}]
  %s6 = inlined_call_operand.vmem [shape: f32[2,1,1], index: 6, kind: input, shape index: {}]
  %s7 = inlined_call_operand.hbm [shape: f32[2,2,128], index: 7, kind: output, shape index: {}]
  %s8 = sld [smem:[#allocation0]]
  $region73: #{tpu_custom_call.1} parent=0
    _
  %s10 = ssub.s32 1, %s8
  %s11 = scalar_select 0, %s10, %s8
  $region1: #{tpu_custom_call.1} parent=0
    #allocation2 [shape = 'u8[1024]{0}', space=vmem, size = 0x400, scoped, tag = 'input window, operand 0, single buffered']
    #allocation3 [shape = 's32[2]{0}', space=sflag, size = 0x8, scoped, tag = 'scoped memory for tpu_custom_call.1']
    #allocation4 [shape = 's32[2]{0}', space=sflag, size = 0x8, scoped, tag = 'scoped memory for tpu_custom_call.1']
    #allocation5 [shape = 'u8[49152]{0}', space=vmem, size = 0xc000, scoped, tag = 'input window, operand 1']
    #allocation6 [shape = 's32[2]{0}', space=sflag, size = 0x8, scoped, tag = 'scoped memory for tpu_custom_call.1']
    #allocation7 [shape = 'u8[589824]{0}', space=vmem, size = 0x90000, scoped, tag = 'input window, operand 3']
    #allocation8 [shape = 'u8[2048]{0}', space=vmem, size = 0x800, scoped, tag = 'output window, operand 0']
    %12 = vsyncpa [#allocation3], 0
    %13 = vsyncpa [#allocation6], 0
    %s14 = scalar_lea.sflag [#allocation6], 1
    %15 = vsyncpa %s14, 0
    %16 = vsyncpa [#allocation4], 0
    %s17 = scalar_lea.sflag [#allocation4], 1
    %18 = vsyncpa %s17, 0
    loop: start=0, step=1, limit=4
    $region2: #{tpu_custom_call.1} parent=1 // loop_pre_header
      _
    $region3: #{tpu_custom_call.1} parent=1 // loop_header
      %s20 = sphi 0, %s24
      %p21 = scmp.ge.s32.totalorder %s20, 4
      %s27 = sphi 0, %s39
      %s28 = sphi 0, %s35
      %s29 = sphi 0, %s27
      %s30 = sphi 0, %s28
      %s31 = sphi 0, %s29
      %s32 = sphi 0, %s30
      %s42 = sphi 0, %s44
      %s45 = sphi 0, %s42
      %s46 = sphi 0, %s45
      %s62 = sphi 0, %s46
      %s68 = sphi 0, %s70
      %s71 = sphi 0, %s68
      %s72 = sphi 0, %s71
      %s88 = sphi 0, %s72
      %s94 = sphi 0, %s96
      %s97 = sphi 0, %s94
      %s98 = sphi 0, %s97
      %s114 = sphi 0, %s98
      %s120 = sphi 0, %s122
      %s123 = sphi 0, %s120
      %s124 = sphi 0, %s123
      %s140 = sphi 0, %s124
      %s146 = sphi 0, %s148
      %s149 = sphi 0, %s146
      %s150 = sphi 0, %s149
      %s166 = sphi 0, %s150
      %s172 = sphi 0, %s174
      %s175 = sphi 0, %s172
      %s176 = sphi 0, %s175
      %s192 = sphi 0, %s176
      %s198 = sphi 0, %s200
      %s201 = sphi 0, %s198
      %s202 = sphi 0, %s201
      %s218 = sphi 0, %s202
      %s226 = sphi 0, %s228
      %s229 = sphi 0, %s226
      %s230 = sphi 0, %s229
      %s246 = sphi 0, %s230
    $region4: #{tpu_custom_call.1} parent=1 // loop_header_branch
      %23 = sbr.rel (%p21) target = $region8
    $region5: #{tpu_custom_call.1} parent=1 // loop_body
      %s25 = ssub.s32 %s20, 1
      %s26 = ssub.s32 %s20, 2
      %s33 = sadd.s32 1, %s28
      %p34 = scmp.ge.s32.totalorder %s33, 1
      %s35 = scalar_select %p34, 0, %s33
      %s36 = sadd.s32 1, %s27
      %s37 = scalar_select %p34, %s36, %s27
      %p38 = scmp.ge.s32.totalorder %s37, 2
      %s39 = scalar_select %p38, 0, %s37
      %s40 = ssub.s32 %s28, %s35
      %p41 = scmp.eq.s32.totalorder %s40, 0
      %s43 = sadd.s32 %s42, 1
      %s44 = scalar_select %p41, %s42, %s43
      %p47 = pneg %p41
      %p48 = scmp.eq.s32.totalorder %s20, 1
      %p49 = por %p47, %p48
      %p50 = scmp.ne.s32.totalorder %s42, %s45
      %p51 = scmp.eq.s32.totalorder %s20, 0
      %p52 = por %p50, %p51
      %p53 = scmp.ne.s32.totalorder %s42, %s45
      %p54 = scmp.eq.s32.totalorder %s25, 1
      %p55 = por %p53, %p54
      %p56 = scmp.ne.s32.totalorder %s45, %s46
      %p57 = scmp.eq.s32.totalorder %s25, 0
      %p58 = por %p56, %p57
      %p59 = scmp.ne.s32.totalorder %s45, %s46
      %p60 = scmp.eq.s32.totalorder %s26, 1
      %p61 = por %p59, %p60
      %p63 = scmp.ne.s32.totalorder %s46, %s62
      %p64 = scmp.eq.s32.totalorder %s26, 0
      %p65 = por %p63, %p64
      %s66 = ssub.s32 %s27, %s39
      %p67 = scmp.eq.s32.totalorder %s66, 0
      %s69 = sadd.s32 %s68, 1
      %s70 = scalar_select %p67, %s68, %s69
      %p73 = pneg %p67
      %p74 = scmp.eq.s32.totalorder %s20, 1
      %p75 = por %p73, %p74
      %p76 = scmp.ne.s32.totalorder %s68, %s71
      %p77 = scmp.eq.s32.totalorder %s20, 0
      %p78 = por %p76, %p77
      %p79 = scmp.ne.s32.totalorder %s68, %s71
      %p80 = scmp.eq.s32.totalorder %s25, 1
      %p81 = por %p79, %p80
      %p82 = scmp.ne.s32.totalorder %s71, %s72
      %p83 = scmp.eq.s32.totalorder %s25, 0
      %p84 = por %p82, %p83
      %p85 = scmp.ne.s32.totalorder %s71, %s72
      %p86 = scmp.eq.s32.totalorder %s26, 1
      %p87 = por %p85, %p86
      %p89 = scmp.ne.s32.totalorder %s72, %s88
      %p90 = scmp.eq.s32.totalorder %s26, 0
      %p91 = por %p89, %p90
      %s92 = ssub.s32 %s27, %s39
      %p93 = scmp.eq.s32.totalorder %s92, 0
      %s95 = sadd.s32 %s94, 1
      %s96 = scalar_select %p93, %s94, %s95
      %p99 = pneg %p93
      %p100 = scmp.eq.s32.totalorder %s20, 1
      %p101 = por %p99, %p100
      %p102 = scmp.ne.s32.totalorder %s94, %s97
      %p103 = scmp.eq.s32.totalorder %s20, 0
      %p104 = por %p102, %p103
      %p105 = scmp.ne.s32.totalorder %s94, %s97
      %p106 = scmp.eq.s32.totalorder %s25, 1
      %p107 = por %p105, %p106
      %p108 = scmp.ne.s32.totalorder %s97, %s98
      %p109 = scmp.eq.s32.totalorder %s25, 0
      %p110 = por %p108, %p109
      %p111 = scmp.ne.s32.totalorder %s97, %s98
      %p112 = scmp.eq.s32.totalorder %s26, 1
      %p113 = por %p111, %p112
      %p115 = scmp.ne.s32.totalorder %s98, %s114
      %p116 = scmp.eq.s32.totalorder %s26, 0
      %p117 = por %p115, %p116
      %s118 = ssub.s32 %s27, %s39
      %p119 = scmp.eq.s32.totalorder %s118, 0
      %s121 = sadd.s32 %s120, 1
      %s122 = scalar_select %p119, %s120, %s121
      %p125 = pneg %p119
      %p126 = scmp.eq.s32.totalorder %s20, 1
      %p127 = por %p125, %p126
      %p128 = scmp.ne.s32.totalorder %s120, %s123
      %p129 = scmp.eq.s32.totalorder %s20, 0
      %p130 = por %p128, %p129
      %p131 = scmp.ne.s32.totalorder %s120, %s123
      %p132 = scmp.eq.s32.totalorder %s25, 1
      %p133 = por %p131, %p132
      %p134 = scmp.ne.s32.totalorder %s123, %s124
      %p135 = scmp.eq.s32.totalorder %s25, 0
      %p136 = por %p134, %p135
      %p137 = scmp.ne.s32.totalorder %s123, %s124
      %p138 = scmp.eq.s32.totalorder %s26, 1
      %p139 = por %p137, %p138
      %p141 = scmp.ne.s32.totalorder %s124, %s140
      %p142 = scmp.eq.s32.totalorder %s26, 0
      %p143 = por %p141, %p142
      %s144 = ssub.s32 %s27, %s39
      %p145 = scmp.eq.s32.totalorder %s144, 0
      %s147 = sadd.s32 %s146, 1
      %s148 = scalar_select %p145, %s146, %s147
      %p151 = pneg %p145
      %p152 = scmp.eq.s32.totalorder %s20, 1
      %p153 = por %p151, %p152
      %p154 = scmp.ne.s32.totalorder %s146, %s149
      %p155 = scmp.eq.s32.totalorder %s20, 0
      %p156 = por %p154, %p155
      %p157 = scmp.ne.s32.totalorder %s146, %s149
      %p158 = scmp.eq.s32.totalorder %s25, 1
      %p159 = por %p157, %p158
      %p160 = scmp.ne.s32.totalorder %s149, %s150
      %p161 = scmp.eq.s32.totalorder %s25, 0
      %p162 = por %p160, %p161
      %p163 = scmp.ne.s32.totalorder %s149, %s150
      %p164 = scmp.eq.s32.totalorder %s26, 1
      %p165 = por %p163, %p164
      %p167 = scmp.ne.s32.totalorder %s150, %s166
      %p168 = scmp.eq.s32.totalorder %s26, 0
      %p169 = por %p167, %p168
      %s170 = ssub.s32 %s27, %s39
      %p171 = scmp.eq.s32.totalorder %s170, 0
      %s173 = sadd.s32 %s172, 1
      %s174 = scalar_select %p171, %s172, %s173
      %p177 = pneg %p171
      %p178 = scmp.eq.s32.totalorder %s20, 1
      %p179 = por %p177, %p178
      %p180 = scmp.ne.s32.totalorder %s172, %s175
      %p181 = scmp.eq.s32.totalorder %s20, 0
      %p182 = por %p180, %p181
      %p183 = scmp.ne.s32.totalorder %s172, %s175
      %p184 = scmp.eq.s32.totalorder %s25, 1
      %p185 = por %p183, %p184
      %p186 = scmp.ne.s32.totalorder %s175, %s176
      %p187 = scmp.eq.s32.totalorder %s25, 0
      %p188 = por %p186, %p187
      %p189 = scmp.ne.s32.totalorder %s175, %s176
      %p190 = scmp.eq.s32.totalorder %s26, 1
      %p191 = por %p189, %p190
      %p193 = scmp.ne.s32.totalorder %s176, %s192
      %p194 = scmp.eq.s32.totalorder %s26, 0
      %p195 = por %p193, %p194
      %s196 = ssub.s32 %s27, %s39
      %p197 = scmp.eq.s32.totalorder %s196, 0
      %s199 = sadd.s32 %s198, 1
      %s200 = scalar_select %p197, %s198, %s199
      %p203 = pneg %p197
      %p204 = scmp.eq.s32.totalorder %s20, 1
      %p205 = por %p203, %p204
      %p206 = scmp.ne.s32.totalorder %s198, %s201
      %p207 = scmp.eq.s32.totalorder %s20, 0
      %p208 = por %p206, %p207
      %p209 = scmp.ne.s32.totalorder %s198, %s201
      %p210 = scmp.eq.s32.totalorder %s25, 1
      %p211 = por %p209, %p210
      %p212 = scmp.ne.s32.totalorder %s201, %s202
      %p213 = scmp.eq.s32.totalorder %s25, 0
      %p214 = por %p212, %p213
      %p215 = scmp.ne.s32.totalorder %s201, %s202
      %p216 = scmp.eq.s32.totalorder %s26, 1
      %p217 = por %p215, %p216
      %p219 = scmp.ne.s32.totalorder %s202, %s218
      %p220 = scmp.eq.s32.totalorder %s26, 0
      %p221 = por %p219, %p220
      %s222 = ssub.s32 %s27, %s39
      %s223 = ssub.s32 %s28, %s35
      %s224 = sor.u32 %s222, %s223
      %p225 = scmp.eq.s32.totalorder %s224, 0
      %s227 = sadd.s32 %s226, 1
      %s228 = scalar_select %p225, %s226, %s227
      %p231 = pneg %p225
      %p232 = scmp.eq.s32.totalorder %s20, 1
      %p233 = por %p231, %p232
      %p234 = scmp.ne.s32.totalorder %s226, %s229
      %p235 = scmp.eq.s32.totalorder %s20, 0
      %p236 = por %p234, %p235
      %p237 = scmp.ne.s32.totalorder %s226, %s229
      %p238 = scmp.eq.s32.totalorder %s25, 1
      %p239 = por %p237, %p238
      %p240 = scmp.ne.s32.totalorder %s229, %s230
      %p241 = scmp.eq.s32.totalorder %s25, 0
      %p242 = por %p240, %p241
      %p243 = scmp.ne.s32.totalorder %s229, %s230
      %p244 = scmp.eq.s32.totalorder %s26, 1
      %p245 = por %p243, %p244
      %p247 = scmp.ne.s32.totalorder %s230, %s246
      %p248 = scmp.eq.s32.totalorder %s26, 0
      %p249 = por %p247, %p248
      %p250 = scmp.le.s32.totalorder 1, %s20
      %p251 = scmp.lt.s32.totalorder %s20, 3
      %p252 = pnand %p250, %p251
      %p253 = pneg %p252
      // Predicated region
      $region9: #{tpu_custom_call.1} parent=5 // pred_check
        _
      $region10: #{tpu_custom_call.1} parent=5 // pred_check_branch
        %255 = sbr.rel (%p252) target = $region12
      $region11: #{tpu_custom_call.1} parent=5 // pred_region
        %s256 = ssub.s32 %s20, 1
        // Predicated region
        $region13: #{tpu_custom_call.1} parent=11 // pred_check
          %p257 = pneg %p58
        $region14: #{tpu_custom_call.1} parent=11 // pred_check_branch
          %259 = sbr.rel (%p257) target = $region16
        $region15: #{tpu_custom_call.1} parent=11 // pred_region
          %s261 = ssub.s32 32, 32
          %262 = vsyncadd [#allocation3], %s261
          %s263 = smul.addr %s30, 32
          %s264 = scalar_lea.hbm %s0, %s263
          %s266 = sshll.u32 [#allocation2], 4
          %s267 = int_to_ptr.vmem [resolvable:$true] %s266
          %269 = dma.hbm_to_vmem [thread:$0]  %s264, 32, %s267, [#allocation3]
        $region16: #{tpu_custom_call.1} parent=11 // pred_fallthru
          _
      $region12: #{tpu_custom_call.1} parent=5 // pred_fallthru
        _
      %p270 = scmp.lt.s32.totalorder %s20, 2
      // Predicated region
      $region17: #{tpu_custom_call.1} parent=5 // pred_check
        %p271 = pneg %p270
      $region18: #{tpu_custom_call.1} parent=5 // pred_check_branch
        %273 = sbr.rel (%p271) target = $region20
      $region19: #{tpu_custom_call.1} parent=5 // pred_region
        // Predicated region
        $region21: #{tpu_custom_call.1} parent=19 // pred_check
          %p274 = pneg %p78
        $region22: #{tpu_custom_call.1} parent=19 // pred_check_branch
          %276 = sbr.rel (%p274) target = $region24
        $region23: #{tpu_custom_call.1} parent=19 // pred_region
          %s277 = sand.u32 %s20, 1
          %s278 = scalar_lea.sflag [#allocation6], %s277
          %s279 = sand.u32 %s68, 1
          %s280 = smul.addr %s279, 48
          %s281 = scalar_lea.vmem [#allocation5], %s280
          %s283 = ssub.s32 768, 768
          %284 = vsyncadd %s278, %s283
          %s285 = smul.addr %s27, 12
          %s286 = smul.addr %s285, 64
          %s287 = scalar_lea.hbm %s1, %s286
          %s288 = sshll.u32 %s281, 4
          %s289 = int_to_ptr.vmem [resolvable:$true] %s288
          %294 = dma.hbm_to_vmem [thread:$0]  %s287, 768, %s289, %s278, 192, 192, 12
        $region24: #{tpu_custom_call.1} parent=19 // pred_fallthru
          _
        // Predicated region
        $region25: #{tpu_custom_call.1} parent=19 // pred_check
          %p295 = pneg %p104
        $region26: #{tpu_custom_call.1} parent=19 // pred_check_branch
          %297 = sbr.rel (%p295) target = $region28
        $region27: #{tpu_custom_call.1} parent=19 // pred_region
          %p298 = scmp.lt.s32.totalorder %s27, 1
          %s299 = scalar_select %p298, %s27, 1
          %s300 = smul.addr %s299, 3
          %s301 = scalar_lea.vmem %s2, %s300
        $region28: #{tpu_custom_call.1} parent=19 // pred_fallthru
          _
        // Predicated region
        $region29: #{tpu_custom_call.1} parent=19 // pred_check
          %p302 = pneg %p130
        $region30: #{tpu_custom_call.1} parent=19 // pred_check_branch
          %304 = sbr.rel (%p302) target = $region32
        $region31: #{tpu_custom_call.1} parent=19 // pred_region
          %s305 = sand.u32 %s20, 1
          %s306 = scalar_lea.sflag [#allocation6], %s305
          %s307 = sand.u32 %s120, 1
          %s308 = smul.addr %s307, 576
          %s309 = scalar_lea.vmem [#allocation7], %s308
          %s311 = ssub.s32 9216, 9216
          %312 = vsyncadd %s306, %s311
          %s313 = smul.addr %s27, 144
          %s314 = smul.addr %s313, 64
          %s315 = scalar_lea.hbm %s3, %s314
          %s316 = sshll.u32 %s309, 4
          %s317 = int_to_ptr.vmem [resolvable:$true] %s316
          %322 = dma.hbm_to_vmem [thread:$0]  %s315, 9216, %s317, %s306, 192, 192, 12
        $region32: #{tpu_custom_call.1} parent=19 // pred_fallthru
          _
        // Predicated region
        $region33: #{tpu_custom_call.1} parent=19 // pred_check
          %p323 = pneg %p156
        $region34: #{tpu_custom_call.1} parent=19 // pred_check_branch
          %325 = sbr.rel (%p323) target = $region36
        $region35: #{tpu_custom_call.1} parent=19 // pred_region
          %p326 = scmp.lt.s32.totalorder %s27, 1
          %s327 = scalar_select %p326, %s27, 1
          %s328 = smul.addr %s327, 3
          %s329 = scalar_lea.vmem %s4, %s328
        $region36: #{tpu_custom_call.1} parent=19 // pred_fallthru
          _
        // Predicated region
        $region37: #{tpu_custom_call.1} parent=19 // pred_check
          %p330 = pneg %p182
        $region38: #{tpu_custom_call.1} parent=19 // pred_check_branch
          %332 = sbr.rel (%p330) target = $region40
        $region39: #{tpu_custom_call.1} parent=19 // pred_region
          %p333 = scmp.lt.s32.totalorder %s27, 1
          %s334 = scalar_select %p333, %s27, 1
          %s335 = smul.addr %s334, 3
          %s336 = scalar_lea.vmem %s5, %s335
        $region40: #{tpu_custom_call.1} parent=19 // pred_fallthru
          _
        // Predicated region
        $region41: #{tpu_custom_call.1} parent=19 // pred_check
          %p337 = pneg %p208
        $region42: #{tpu_custom_call.1} parent=19 // pred_check_branch
          %339 = sbr.rel (%p337) target = $region44
        $region43: #{tpu_custom_call.1} parent=19 // pred_region
          %p340 = scmp.lt.s32.totalorder %s27, 1
          %s341 = scalar_select %p340, %s27, 1
          %s342 = scalar_lea.vmem %s6, %s341
        $region44: #{tpu_custom_call.1} parent=19 // pred_fallthru
          _
      $region20: #{tpu_custom_call.1} parent=5 // pred_fallthru
        _
      %p343 = scmp.le.s32.totalorder 1, %s20
      %p344 = scmp.lt.s32.totalorder %s20, 3
      %p345 = pnand %p343, %p344
      %p346 = pneg %p345
      // Predicated region
      $region45: #{tpu_custom_call.1} parent=5 // pred_check
        _
      $region46: #{tpu_custom_call.1} parent=5 // pred_check_branch
        %348 = sbr.rel (%p345) target = $region48
      $region47: #{tpu_custom_call.1} parent=5 // pred_region
        %s349 = ssub.s32 %s20, 1
        // Predicated region
        $region49: #{tpu_custom_call.1} parent=47 // pred_check
          %p350 = pneg %p58
        $region50: #{tpu_custom_call.1} parent=47 // pred_check_branch
          %352 = sbr.rel (%p350) target = $region52
        $region51: #{tpu_custom_call.1} parent=47 // pred_region
          %353 = dma.done [#allocation3], 32
        $region52: #{tpu_custom_call.1} parent=47 // pred_fallthru
          _
        %s354 = sand.u32 %s25, 1
        %s355 = scalar_lea.sflag [#allocation6], %s354
        %s356 = sand.u32 %s71, 1
        %s357 = smul.addr %s356, 48
        %s358 = scalar_lea.vmem [#allocation5], %s357
        // Predicated region
        $region53: #{tpu_custom_call.1} parent=47 // pred_check
          %p359 = pneg %p84
        $region54: #{tpu_custom_call.1} parent=47 // pred_check_branch
          %361 = sbr.rel (%p359) target = $region56
        $region55: #{tpu_custom_call.1} parent=47 // pred_region
          %362 = dma.done %s355, 768
        $region56: #{tpu_custom_call.1} parent=47 // pred_fallthru
          _
        %s363 = sand.u32 %s25, 1
        %s364 = scalar_lea.sflag [#allocation6], %s363
        %s365 = sand.u32 %s123, 1
        %s366 = smul.addr %s365, 576
        %s367 = scalar_lea.vmem [#allocation7], %s366
        // Predicated region
        $region57: #{tpu_custom_call.1} parent=47 // pred_check
          %p368 = pneg %p136
        $region58: #{tpu_custom_call.1} parent=47 // pred_check_branch
          %370 = sbr.rel (%p368) target = $region60
        $region59: #{tpu_custom_call.1} parent=47 // pred_region
          %371 = dma.done %s364, 9216
        $region60: #{tpu_custom_call.1} parent=47 // pred_fallthru
          _
        %p372 = pneg %p58
        %p373 = pneg %p55
        %s374 = sand.u32 %s25, 1
        %s375 = scalar_lea.sflag [#allocation6], %s374
        %s376 = sand.u32 %s71, 1
        %s377 = smul.addr %s376, 48
        %s378 = scalar_lea.vmem [#allocation5], %s377
        %p379 = pneg %p84
        %p380 = pneg %p81
        %p381 = scmp.lt.s32.totalorder %s29, 1
        %s382 = scalar_select %p381, %s29, 1
        %s383 = smul.addr %s382, 3
        %s384 = scalar_lea.vmem %s2, %s383
        %p385 = pneg %p110
        %p386 = pneg %p107
        %s387 = sand.u32 %s25, 1
        %s388 = scalar_lea.sflag [#allocation6], %s387
        %s389 = sand.u32 %s123, 1
        %s390 = smul.addr %s389, 576
        %s391 = scalar_lea.vmem [#allocation7], %s390
        %p392 = pneg %p136
        %p393 = pneg %p133
        %p394 = scmp.lt.s32.totalorder %s29, 1
        %s395 = scalar_select %p394, %s29, 1
        %s396 = smul.addr %s395, 3
        %s397 = scalar_lea.vmem %s4, %s396
        %p398 = pneg %p162
        %p399 = pneg %p159
        %p400 = scmp.lt.s32.totalorder %s29, 1
        %s401 = scalar_select %p400, %s29, 1
        %s402 = smul.addr %s401, 3
        %s403 = scalar_lea.vmem %s5, %s402
        %p404 = pneg %p188
        %p405 = pneg %p185
        %p406 = scmp.lt.s32.totalorder %s29, 1
        %s407 = scalar_select %p406, %s29, 1
        %s408 = scalar_lea.vmem %s6, %s407
        %p409 = pneg %p214
        %p410 = pneg %p211
        %p411 = pneg %p242
        %p412 = pneg %p239
        %s413 = sand.u32 %s229, 1
        %s414 = scalar_lea.sflag [#allocation4], %s413
        %s415 = sand.u32 %s229, 1
        %s416 = smul.addr %s415, 2
        %s417 = scalar_lea.vmem [#allocation8], %s416
        %p418 = scmp.lt.s32.totalorder %s29, 1
        %s419 = scalar_select %p418, %s29, 1
        %s420 = smul.addr %s419, 3
        %s421 = scalar_lea.vmem %s2, %s420
        %p422 = scmp.lt.s32.totalorder %s29, 1
        %s423 = scalar_select %p422, %s29, 1
        %s424 = smul.addr %s423, 3
        %s425 = scalar_lea.vmem %s4, %s424
        %p426 = scmp.lt.s32.totalorder %s29, 1
        %s427 = scalar_select %p426, %s29, 1
        %s428 = smul.addr %s427, 3
        %s429 = scalar_lea.vmem %s5, %s428
        %p430 = scmp.lt.s32.totalorder %s29, 1
        %s431 = scalar_select %p430, %s29, 1
        %s432 = scalar_lea.vmem %s6, %s431
        %v434 = vld [vmem:[#allocation2] sm:$0x3]
        %v435 = vpack.c.bf16 %v434, %v434
        %v436 = vld [vmem:[%s358] sm:$0xff]
        %v437 = vld [vmem:[%s358 + $0x8] sm:$0xf]
        %v438 = vld [vmem:[%s358 + $0xc] sm:$0xff]
        %v439 = vld [vmem:[%s358 + $0x14] sm:$0xf]
        %v440 = vld [vmem:[%s358 + $0x18] sm:$0xff]
        %v441 = vld [vmem:[%s358 + $0x20] sm:$0xf]
        %v442 = vld [vmem:[%s358 + $0x24] sm:$0xff]
        %v443 = vld [vmem:[%s358 + $0x2c] sm:$0xf]
        %v444 = vld [vmem:[%s421] sm:$0x7]
        %v446 = vlaneseq
        %v447 = vshrl.u32 %v446, 7
        %v448 = vsub.s32 0, %v447
        %v449 = vrot.slane %v444, %v448
        %v450 = vlaneseq
        %v451 = vshrl.u32 %v450, 7
        %v452 = vsub.s32 1, %v451
        %v453 = vrot.slane %v444, %v452
        %v454 = vlaneseq
        %v455 = vshrl.u32 %v454, 7
        %v456 = vsub.s32 2, %v455
        %v457 = vrot.slane %v444, %v456
        %v469 = vunpack.c.l.b16 %v436
        %v470 = vunpack.c.h.b16 %v436
        %v471 = vunpack.c.l.b16 %v437
        %v472 = vunpack.c.l.b16 %v438
        %v473 = vunpack.c.h.b16 %v438
        %v474 = vunpack.c.l.b16 %v439
        %v475 = vunpack.c.l.b16 %v440
        %v476 = vunpack.c.h.b16 %v440
        %v477 = vunpack.c.l.b16 %v441
        %v478 = vunpack.c.l.b16 %v442
        %v479 = vunpack.c.h.b16 %v442
        %v480 = vunpack.c.l.b16 %v443
        %v481 = vpack.c.b16 %v472, %v469
        %v482 = vpack.c.b16 %v473, %v470
        %v483 = vpack.c.b16 %v474, %v471
        %v484 = vpack.c.b16 %v478, %v475
        %v485 = vpack.c.b16 %v479, %v476
        %v486 = vpack.c.b16 %v480, %v477
        %vm493 = vcmask 261120
        %v495 = vsel %vm493, %v435, 0
        %497 = vmatprep.subr.bf16.mxu0 %v482
        %498 = vmatpush1.bf16.msra.mxu0 %v481
        %499 = vmatprep.subr.bf16.mxu0 %v485
        %500 = vmatpush1.bf16.msra.mxu0 %v484
        %501 = vmatprep.subr.bf16.mxu0 0
        %502 = vmatpush1.bf16.msra.mxu0 0
        %503 = vmatprep.subr.bf16.mxu0 0
        %504 = vmatpush1.bf16.msra.mxu0 0
        %505 = vmatprep.subr.bf16.mxu0 0
        %506 = vmatpush1.bf16.msra.mxu0 0
        %507 = vmatprep.subr.bf16.mxu0 0
        %508 = vmatpush1.bf16.msra.mxu0 0
        %509 = vmatprep.subr.bf16.mxu0 0
        %510 = vmatpush1.bf16.msra.mxu0 0
        %511 = vmatprep.subr.bf16.mxu0 0
        %512 = vmatpush1.bf16.msra.mxu0 0
        %513 = vmatprep.subr.bf16.mxu0 0
        %514 = vmatpush1.bf16.msra.mxu0 0
        %515 = vmatprep.subr.bf16.mxu0 0
        %516 = vmatpush1.bf16.msra.mxu0 0
        %517 = vmatprep.subr.bf16.mxu0 0
        %518 = vmatpush1.bf16.msra.mxu0 0
        %519 = vmatprep.subr.bf16.mxu0 0
        %520 = vmatpush1.bf16.msra.mxu0 0
        %521 = vmatprep.subr.bf16.mxu0 0
        %522 = vmatpush1.bf16.msra.mxu0 0
        %523 = vmatprep.subr.bf16.mxu0 0
        %524 = vmatpush1.bf16.msra.mxu0 0
        %525 = vmatprep.subr.bf16.mxu0 0
        %526 = vmatpush1.bf16.msra.mxu0 0
        %527 = vmatprep.subr.bf16.mxu0 0
        %528 = vmatpush1.bf16.msra.mxu0 0
        %529 = vmatprep.mubr.bf16.mxu0 0
        %530 = vmatmul.mubr.bf16.gmra.mrb[0].mxu0 %v495
        %v531 = vpop.f32.mrb[0].mxu0
        %v532 = vadd.f32 %v449, %v531
        %v533 = vpop.f32.mrb[0].mxu0
        %v534 = vadd.f32 %v453, %v533
        %v535 = vpop.f32.mrb[0].mxu0
        %v536 = vpop.f32.mrb[0].mxu0
        %537 = vdwg.mxu0
        %538 = vmatprep.subr.bf16.mxu0 0
        %539 = vmatpush1.bf16.msra.mxu0 %v483
        %540 = vmatprep.subr.bf16.mxu0 0
        %541 = vmatpush1.bf16.msra.mxu0 %v486
        %542 = vmatprep.subr.bf16.mxu0 0
        %543 = vmatpush1.bf16.msra.mxu0 0
        %544 = vmatprep.subr.bf16.mxu0 0
        %545 = vmatpush1.bf16.msra.mxu0 0
        %546 = vmatprep.subr.bf16.mxu0 0
        %547 = vmatpush1.bf16.msra.mxu0 0
        %548 = vmatprep.subr.bf16.mxu0 0
        %549 = vmatpush1.bf16.msra.mxu0 0
        %550 = vmatprep.subr.bf16.mxu0 0
        %551 = vmatpush1.bf16.msra.mxu0 0
        %552 = vmatprep.subr.bf16.mxu0 0
        %553 = vmatpush1.bf16.msra.mxu0 0
        %554 = vmatprep.subr.bf16.mxu0 0
        %555 = vmatpush1.bf16.msra.mxu0 0
        %556 = vmatprep.subr.bf16.mxu0 0
        %557 = vmatpush1.bf16.msra.mxu0 0
        %558 = vmatprep.subr.bf16.mxu0 0
        %559 = vmatpush1.bf16.msra.mxu0 0
        %560 = vmatprep.subr.bf16.mxu0 0
        %561 = vmatpush1.bf16.msra.mxu0 0
        %562 = vmatprep.subr.bf16.mxu0 0
        %563 = vmatpush1.bf16.msra.mxu0 0
        %564 = vmatprep.subr.bf16.mxu0 0
        %565 = vmatpush1.bf16.msra.mxu0 0
        %566 = vmatprep.subr.bf16.mxu0 0
        %567 = vmatpush1.bf16.msra.mxu0 0
        %568 = vmatprep.subr.bf16.mxu0 0
        %569 = vmatpush1.bf16.msra.mxu0 0
        %570 = vmatprep.mubr.bf16.mxu0 0
        %571 = vmatmul.mubr.bf16.gmra.mrb[0].mxu0 %v495
        %v572 = vpop.f32.mrb[0].mxu0
        %v573 = vadd.f32 %v457, %v572
        %v574 = vpop.f32.mrb[0].mxu0
        %v575 = vpop.f32.mrb[0].mxu0
        %v576 = vpop.f32.mrb[0].mxu0
        %577 = vdwg.mxu0
        %v578 = vmax.f32 %v532, 0.0
        %v579 = vmax.f32 %v534, 0.0
        %v580 = vmax.f32 %v573, 0.0
        %v581 = vpack.c.bf16 %v578, %v578
        %v582 = vpack.c.bf16 %v579, %v579
        %v583 = vpack.c.bf16 %v580, %v580
        %v584 = vld [vmem:[%s367] sm:$0xff]
        %v585 = vld [vmem:[%s367 + $0x8] sm:$0xf]
        %v586 = vld [vmem:[%s367 + $0xc] sm:$0xff]
        %v587 = vld [vmem:[%s367 + $0x14] sm:$0xf]
        %v588 = vld [vmem:[%s367 + $0x18] sm:$0xff]
        %v589 = vld [vmem:[%s367 + $0x20] sm:$0xf]
        %v590 = vld [vmem:[%s367 + $0x24] sm:$0xff]
        %v591 = vld [vmem:[%s367 + $0x2c] sm:$0xf]
        %v592 = vld [vmem:[%s367 + $0x30] sm:$0xff]
        %v593 = vld [vmem:[%s367 + $0x38] sm:$0xf]
        %v594 = vld [vmem:[%s367 + $0x3c] sm:$0xff]
        %v595 = vld [vmem:[%s367 + $0x44] sm:$0xf]
        %v596 = vld [vmem:[%s367 + $0x48] sm:$0xff]
        %v597 = vld [vmem:[%s367 + $0x50] sm:$0xf]
        %v598 = vld [vmem:[%s367 + $0x54] sm:$0xff]
        %v599 = vld [vmem:[%s367 + $0x5c] sm:$0xf]
        %v600 = vld [vmem:[%s367 + $0x60] sm:$0xff]
        %v601 = vld [vmem:[%s367 + $0x68] sm:$0xf]
        %v602 = vld [vmem:[%s367 + $0x6c] sm:$0xff]
        %v603 = vld [vmem:[%s367 + $0x74] sm:$0xf]
        %v604 = vld [vmem:[%s367 + $0x78] sm:$0xff]
        %v605 = vld [vmem:[%s367 + $0x80] sm:$0xf]
        %v606 = vld [vmem:[%s367 + $0x84] sm:$0xff]
        %v607 = vld [vmem:[%s367 + $0x8c] sm:$0xf]
        %v608 = vld [vmem:[%s367 + $0x90] sm:$0xff]
        %v609 = vld [vmem:[%s367 + $0x98] sm:$0xf]
        %v610 = vld [vmem:[%s367 + $0x9c] sm:$0xff]
        %v611 = vld [vmem:[%s367 + $0xa4] sm:$0xf]
        %v612 = vld [vmem:[%s367 + $0xa8] sm:$0xff]
        %v613 = vld [vmem:[%s367 + $0xb0] sm:$0xf]
        %v614 = vld [vmem:[%s367 + $0xb4] sm:$0xff]
        %v615 = vld [vmem:[%s367 + $0xbc] sm:$0xf]
        %v616 = vld [vmem:[%s367 + $0xc0] sm:$0xff]
        %v617 = vld [vmem:[%s367 + $0xc8] sm:$0xf]
        %v618 = vld [vmem:[%s367 + $0xcc] sm:$0xff]
        %v619 = vld [vmem:[%s367 + $0xd4] sm:$0xf]
        %v620 = vld [vmem:[%s367 + $0xd8] sm:$0xff]
        %v621 = vld [vmem:[%s367 + $0xe0] sm:$0xf]
        %v622 = vld [vmem:[%s367 + $0xe4] sm:$0xff]
        %v623 = vld [vmem:[%s367 + $0xec] sm:$0xf]
        %v624 = vld [vmem:[%s367 + $0xf0] sm:$0xff]
        %v625 = vld [vmem:[%s367 + $0xf8] sm:$0xf]
        %v626 = vld [vmem:[%s367 + $0xfc] sm:$0xff]
        %v627 = vld [vmem:[%s367 + $0x104] sm:$0xf]
        %v628 = vld [vmem:[%s367 + $0x108] sm:$0xff]
        %v629 = vld [vmem:[%s367 + $0x110] sm:$0xf]
        %v630 = vld [vmem:[%s367 + $0x114] sm:$0xff]
        %v631 = vld [vmem:[%s367 + $0x11c] sm:$0xf]
        %v632 = vld [vmem:[%s367 + $0x120] sm:$0xff]
        %v633 = vld [vmem:[%s367 + $0x128] sm:$0xf]
        %v634 = vld [vmem:[%s367 + $0x12c] sm:$0xff]
        %v635 = vld [vmem:[%s367 + $0x134] sm:$0xf]
        %v636 = vld [vmem:[%s367 + $0x138] sm:$0xff]
        %v637 = vld [vmem:[%s367 + $0x140] sm:$0xf]
        %v638 = vld [vmem:[%s367 + $0x144] sm:$0xff]
        %v639 = vld [vmem:[%s367 + $0x14c] sm:$0xf]
        %v640 = vld [vmem:[%s367 + $0x150] sm:$0xff]
        %v641 = vld [vmem:[%s367 + $0x158] sm:$0xf]
        %v642 = vld [vmem:[%s367 + $0x15c] sm:$0xff]
        %v643 = vld [vmem:[%s367 + $0x164] sm:$0xf]
        %v644 = vld [vmem:[%s367 + $0x168] sm:$0xff]
        %v645 = vld [vmem:[%s367 + $0x170] sm:$0xf]
        %v646 = vld [vmem:[%s367 + $0x174] sm:$0xff]
        %v647 = vld [vmem:[%s367 + $0x17c] sm:$0xf]
        %v648 = vld [vmem:[%s367 + $0x180] sm:$0xff]
        %v649 = vld [vmem:[%s367 + $0x188] sm:$0xf]
        %v650 = vld [vmem:[%s367 + $0x18c] sm:$0xff]
        %v651 = vld [vmem:[%s367 + $0x194] sm:$0xf]
        %v652 = vld [vmem:[%s367 + $0x198] sm:$0xff]
        %v653 = vld [vmem:[%s367 + $0x1a0] sm:$0xf]
        %v654 = vld [vmem:[%s367 + $0x1a4] sm:$0xff]
        %v655 = vld [vmem:[%s367 + $0x1ac] sm:$0xf]
        %v656 = vld [vmem:[%s367 + $0x1b0] sm:$0xff]
        %v657 = vld [vmem:[%s367 + $0x1b8] sm:$0xf]
        %v658 = vld [vmem:[%s367 + $0x1bc] sm:$0xff]
        %v659 = vld [vmem:[%s367 + $0x1c4] sm:$0xf]
        %v660 = vld [vmem:[%s367 + $0x1c8] sm:$0xff]
        %v661 = vld [vmem:[%s367 + $0x1d0] sm:$0xf]
        %v662 = vld [vmem:[%s367 + $0x1d4] sm:$0xff]
        %v663 = vld [vmem:[%s367 + $0x1dc] sm:$0xf]
        %v664 = vld [vmem:[%s367 + $0x1e0] sm:$0xff]
        %v665 = vld [vmem:[%s367 + $0x1e8] sm:$0xf]
        %v666 = vld [vmem:[%s367 + $0x1ec] sm:$0xff]
        %v667 = vld [vmem:[%s367 + $0x1f4] sm:$0xf]
        %v668 = vld [vmem:[%s367 + $0x1f8] sm:$0xff]
        %v669 = vld [vmem:[%s367 + $0x200] sm:$0xf]
        %v670 = vld [vmem:[%s367 + $0x204] sm:$0xff]
        %v671 = vld [vmem:[%s367 + $0x20c] sm:$0xf]
        %v672 = vld [vmem:[%s367 + $0x210] sm:$0xff]
        %v673 = vld [vmem:[%s367 + $0x218] sm:$0xf]
        %v674 = vld [vmem:[%s367 + $0x21c] sm:$0xff]
        %v675 = vld [vmem:[%s367 + $0x224] sm:$0xf]
        %v676 = vld [vmem:[%s367 + $0x228] sm:$0xff]
        %v677 = vld [vmem:[%s367 + $0x230] sm:$0xf]
        %v678 = vld [vmem:[%s367 + $0x234] sm:$0xff]
        %v679 = vld [vmem:[%s367 + $0x23c] sm:$0xf]
        %v680 = vld [vmem:[%s425] sm:$0x7]
        %v682 = vlaneseq
        %v683 = vshrl.u32 %v682, 7
        %v684 = vsub.s32 0, %v683
        %v685 = vrot.slane %v680, %v684
        %v686 = vlaneseq
        %v687 = vshrl.u32 %v686, 7
        %v688 = vsub.s32 1, %v687
        %v689 = vrot.slane %v680, %v688
        %v690 = vlaneseq
        %v691 = vshrl.u32 %v690, 7
        %v692 = vsub.s32 2, %v691
        %v693 = vrot.slane %v680, %v692
        %v793 = vunpack.c.l.b16 %v584
        %v794 = vunpack.c.h.b16 %v584
        %v795 = vunpack.c.l.b16 %v585
        %v796 = vunpack.c.l.b16 %v586
        %v797 = vunpack.c.h.b16 %v586
        %v798 = vunpack.c.l.b16 %v587
        %v799 = vunpack.c.l.b16 %v588
        %v800 = vunpack.c.h.b16 %v588
        %v801 = vunpack.c.l.b16 %v589
        %v802 = vunpack.c.l.b16 %v590
        %v803 = vunpack.c.h.b16 %v590
        %v804 = vunpack.c.l.b16 %v591
        %v805 = vunpack.c.l.b16 %v592
        %v806 = vunpack.c.h.b16 %v592
        %v807 = vunpack.c.l.b16 %v593
        %v808 = vunpack.c.l.b16 %v594
        %v809 = vunpack.c.h.b16 %v594
        %v810 = vunpack.c.l.b16 %v595
        %v811 = vunpack.c.l.b16 %v596
        %v812 = vunpack.c.h.b16 %v596
        %v813 = vunpack.c.l.b16 %v597
        %v814 = vunpack.c.l.b16 %v598
        %v815 = vunpack.c.h.b16 %v598
        %v816 = vunpack.c.l.b16 %v599
        %v817 = vunpack.c.l.b16 %v600
        %v818 = vunpack.c.h.b16 %v600
        %v819 = vunpack.c.l.b16 %v601
        %v820 = vunpack.c.l.b16 %v602
        %v821 = vunpack.c.h.b16 %v602
        %v822 = vunpack.c.l.b16 %v603
        %v823 = vunpack.c.l.b16 %v604
        %v824 = vunpack.c.h.b16 %v604
        %v825 = vunpack.c.l.b16 %v605
        %v826 = vunpack.c.l.b16 %v606
        %v827 = vunpack.c.h.b16 %v606
        %v828 = vunpack.c.l.b16 %v607
        %v829 = vunpack.c.l.b16 %v608
        %v830 = vunpack.c.h.b16 %v608
        %v831 = vunpack.c.l.b16 %v609
        %v832 = vunpack.c.l.b16 %v610
        %v833 = vunpack.c.h.b16 %v610
        %v834 = vunpack.c.l.b16 %v611
        %v835 = vunpack.c.l.b16 %v612
        %v836 = vunpack.c.h.b16 %v612
        %v837 = vunpack.c.l.b16 %v613
        %v838 = vunpack.c.l.b16 %v614
        %v839 = vunpack.c.h.b16 %v614
        %v840 = vunpack.c.l.b16 %v615
        %v841 = vunpack.c.l.b16 %v616
        %v842 = vunpack.c.h.b16 %v616
        %v843 = vunpack.c.l.b16 %v617
        %v844 = vunpack.c.l.b16 %v618
        %v845 = vunpack.c.h.b16 %v618
        %v846 = vunpack.c.l.b16 %v619
        %v847 = vunpack.c.l.b16 %v620
        %v848 = vunpack.c.h.b16 %v620
        %v849 = vunpack.c.l.b16 %v621
        %v850 = vunpack.c.l.b16 %v622
        %v851 = vunpack.c.h.b16 %v622
        %v852 = vunpack.c.l.b16 %v623
        %v853 = vunpack.c.l.b16 %v624
        %v854 = vunpack.c.h.b16 %v624
        %v855 = vunpack.c.l.b16 %v625
        %v856 = vunpack.c.l.b16 %v626
        %v857 = vunpack.c.h.b16 %v626
        %v858 = vunpack.c.l.b16 %v627
        %v859 = vunpack.c.l.b16 %v628
        %v860 = vunpack.c.h.b16 %v628
        %v861 = vunpack.c.l.b16 %v629
        %v862 = vunpack.c.l.b16 %v630
        %v863 = vunpack.c.h.b16 %v630
        %v864 = vunpack.c.l.b16 %v631
        %v865 = vunpack.c.l.b16 %v632
        %v866 = vunpack.c.h.b16 %v632
        %v867 = vunpack.c.l.b16 %v633
        %v868 = vunpack.c.l.b16 %v634
        %v869 = vunpack.c.h.b16 %v634
        %v870 = vunpack.c.l.b16 %v635
        %v871 = vunpack.c.l.b16 %v636
        %v872 = vunpack.c.h.b16 %v636
        %v873 = vunpack.c.l.b16 %v637
        %v874 = vunpack.c.l.b16 %v638
        %v875 = vunpack.c.h.b16 %v638
        %v876 = vunpack.c.l.b16 %v639
        %v877 = vunpack.c.l.b16 %v640
        %v878 = vunpack.c.h.b16 %v640
        %v879 = vunpack.c.l.b16 %v641
        %v880 = vunpack.c.l.b16 %v642
        %v881 = vunpack.c.h.b16 %v642
        %v882 = vunpack.c.l.b16 %v643
        %v883 = vunpack.c.l.b16 %v644
        %v884 = vunpack.c.h.b16 %v644
        %v885 = vunpack.c.l.b16 %v645
        %v886 = vunpack.c.l.b16 %v646
        %v887 = vunpack.c.h.b16 %v646
        %v888 = vunpack.c.l.b16 %v647
        %v889 = vunpack.c.l.b16 %v648
        %v890 = vunpack.c.h.b16 %v648
        %v891 = vunpack.c.l.b16 %v649
        %v892 = vunpack.c.l.b16 %v650
        %v893 = vunpack.c.h.b16 %v650
        %v894 = vunpack.c.l.b16 %v651
        %v895 = vunpack.c.l.b16 %v652
        %v896 = vunpack.c.h.b16 %v652
        %v897 = vunpack.c.l.b16 %v653
        %v898 = vunpack.c.l.b16 %v654
        %v899 = vunpack.c.h.b16 %v654
        %v900 = vunpack.c.l.b16 %v655
        %v901 = vunpack.c.l.b16 %v656
        %v902 = vunpack.c.h.b16 %v656
        %v903 = vunpack.c.l.b16 %v657
        %v904 = vunpack.c.l.b16 %v658
        %v905 = vunpack.c.h.b16 %v658
        %v906 = vunpack.c.l.b16 %v659
        %v907 = vunpack.c.l.b16 %v660
        %v908 = vunpack.c.h.b16 %v660
        %v909 = vunpack.c.l.b16 %v661
        %v910 = vunpack.c.l.b16 %v662
        %v911 = vunpack.c.h.b16 %v662
        %v912 = vunpack.c.l.b16 %v663
        %v913 = vunpack.c.l.b16 %v664
        %v914 = vunpack.c.h.b16 %v664
        %v915 = vunpack.c.l.b16 %v665
        %v916 = vunpack.c.l.b16 %v666
        %v917 = vunpack.c.h.b16 %v666
        %v918 = vunpack.c.l.b16 %v667
        %v919 = vunpack.c.l.b16 %v668
        %v920 = vunpack.c.h.b16 %v668
        %v921 = vunpack.c.l.b16 %v669
        %v922 = vunpack.c.l.b16 %v670
        %v923 = vunpack.c.h.b16 %v670
        %v924 = vunpack.c.l.b16 %v671
        %v925 = vunpack.c.l.b16 %v672
        %v926 = vunpack.c.h.b16 %v672
        %v927 = vunpack.c.l.b16 %v673
        %v928 = vunpack.c.l.b16 %v674
        %v929 = vunpack.c.h.b16 %v674
        %v930 = vunpack.c.l.b16 %v675
        %v931 = vunpack.c.l.b16 %v676
        %v932 = vunpack.c.h.b16 %v676
        %v933 = vunpack.c.l.b16 %v677
        %v934 = vunpack.c.l.b16 %v678
        %v935 = vunpack.c.h.b16 %v678
        %v936 = vunpack.c.l.b16 %v679
        %v937 = vpack.c.b16 %v796, %v793
        %v938 = vpack.c.b16 %v797, %v794
        %v939 = vpack.c.b16 %v798, %v795
        %v940 = vpack.c.b16 %v802, %v799
        %v941 = vpack.c.b16 %v803, %v800
        %v942 = vpack.c.b16 %v804, %v801
        %v943 = vpack.c.b16 %v808, %v805
        %v944 = vpack.c.b16 %v809, %v806
        %v945 = vpack.c.b16 %v810, %v807
        %v946 = vpack.c.b16 %v814, %v811
        %v947 = vpack.c.b16 %v815, %v812
        %v948 = vpack.c.b16 %v816, %v813
        %v949 = vpack.c.b16 %v820, %v817
        %v950 = vpack.c.b16 %v821, %v818
        %v951 = vpack.c.b16 %v822, %v819
        %v952 = vpack.c.b16 %v826, %v823
        %v953 = vpack.c.b16 %v827, %v824
        %v954 = vpack.c.b16 %v828, %v825
        %v955 = vpack.c.b16 %v832, %v829
        %v956 = vpack.c.b16 %v833, %v830
        %v957 = vpack.c.b16 %v834, %v831
        %v958 = vpack.c.b16 %v838, %v835
        %v959 = vpack.c.b16 %v839, %v836
        %v960 = vpack.c.b16 %v840, %v837
        %v961 = vpack.c.b16 %v844, %v841
        %v962 = vpack.c.b16 %v845, %v842
        %v963 = vpack.c.b16 %v846, %v843
        %v964 = vpack.c.b16 %v850, %v847
        %v965 = vpack.c.b16 %v851, %v848
        %v966 = vpack.c.b16 %v852, %v849
        %v967 = vpack.c.b16 %v856, %v853
        %v968 = vpack.c.b16 %v857, %v854
        %v969 = vpack.c.b16 %v858, %v855
        %v970 = vpack.c.b16 %v862, %v859
        %v971 = vpack.c.b16 %v863, %v860
        %v972 = vpack.c.b16 %v864, %v861
        %v973 = vpack.c.b16 %v868, %v865
        %v974 = vpack.c.b16 %v869, %v866
        %v975 = vpack.c.b16 %v870, %v867
        %v976 = vpack.c.b16 %v874, %v871
        %v977 = vpack.c.b16 %v875, %v872
        %v978 = vpack.c.b16 %v876, %v873
        %v979 = vpack.c.b16 %v880, %v877
        %v980 = vpack.c.b16 %v881, %v878
        %v981 = vpack.c.b16 %v882, %v879
        %v982 = vpack.c.b16 %v886, %v883
        %v983 = vpack.c.b16 %v887, %v884
        %v984 = vpack.c.b16 %v888, %v885
        %v985 = vpack.c.b16 %v892, %v889
        %v986 = vpack.c.b16 %v893, %v890
        %v987 = vpack.c.b16 %v894, %v891
        %v988 = vpack.c.b16 %v898, %v895
        %v989 = vpack.c.b16 %v899, %v896
        %v990 = vpack.c.b16 %v900, %v897
        %v991 = vpack.c.b16 %v904, %v901
        %v992 = vpack.c.b16 %v905, %v902
        %v993 = vpack.c.b16 %v906, %v903
        %v994 = vpack.c.b16 %v910, %v907
        %v995 = vpack.c.b16 %v911, %v908
        %v996 = vpack.c.b16 %v912, %v909
        %v997 = vpack.c.b16 %v916, %v913
        %v998 = vpack.c.b16 %v917, %v914
        %v999 = vpack.c.b16 %v918, %v915
        %v1000 = vpack.c.b16 %v922, %v919
        %v1001 = vpack.c.b16 %v923, %v920
        %v1002 = vpack.c.b16 %v924, %v921
        %v1003 = vpack.c.b16 %v928, %v925
        %v1004 = vpack.c.b16 %v929, %v926
        %v1005 = vpack.c.b16 %v930, %v927
        %v1006 = vpack.c.b16 %v934, %v931
        %v1007 = vpack.c.b16 %v935, %v932
        %v1008 = vpack.c.b16 %v936, %v933
        %1081 = vmatprep.subr.bf16.mxu0 %v938
        %1082 = vmatpush1.bf16.msra.mxu0 %v937
        %1083 = vmatprep.subr.bf16.mxu0 %v941
        %1084 = vmatpush1.bf16.msra.mxu0 %v940
        %1085 = vmatprep.subr.bf16.mxu0 %v944
        %1086 = vmatpush1.bf16.msra.mxu0 %v943
        %1087 = vmatprep.subr.bf16.mxu0 %v947
        %1088 = vmatpush1.bf16.msra.mxu0 %v946
        %1089 = vmatprep.subr.bf16.mxu0 %v950
        %1090 = vmatpush1.bf16.msra.mxu0 %v949
        %1091 = vmatprep.subr.bf16.mxu0 %v953
        %1092 = vmatpush1.bf16.msra.mxu0 %v952
        %1093 = vmatprep.subr.bf16.mxu0 %v956
        %1094 = vmatpush1.bf16.msra.mxu0 %v955
        %1095 = vmatprep.subr.bf16.mxu0 %v959
        %1096 = vmatpush1.bf16.msra.mxu0 %v958
        %1097 = vmatprep.subr.bf16.mxu0 %v962
        %1098 = vmatpush1.bf16.msra.mxu0 %v961
        %1099 = vmatprep.subr.bf16.mxu0 %v965
        %1100 = vmatpush1.bf16.msra.mxu0 %v964
        %1101 = vmatprep.subr.bf16.mxu0 %v968
        %1102 = vmatpush1.bf16.msra.mxu0 %v967
        %1103 = vmatprep.subr.bf16.mxu0 %v971
        %1104 = vmatpush1.bf16.msra.mxu0 %v970
        %1105 = vmatprep.subr.bf16.mxu0 %v974
        %1106 = vmatpush1.bf16.msra.mxu0 %v973
        %1107 = vmatprep.subr.bf16.mxu0 %v977
        %1108 = vmatpush1.bf16.msra.mxu0 %v976
        %1109 = vmatprep.subr.bf16.mxu0 %v980
        %1110 = vmatpush1.bf16.msra.mxu0 %v979
        %1111 = vmatprep.subr.bf16.mxu0 %v983
        %1112 = vmatpush1.bf16.msra.mxu0 %v982
        %1113 = vmatprep.mubr.bf16.mxu0 %v582
        %1114 = vmatmul.mubr.bf16.gmra.mrb[0].mxu0 %v581
        %v1115 = vpop.f32.mrb[0].mxu0
        %v1116 = vadd.f32 %v685, %v1115
        %v1117 = vpop.f32.mrb[0].mxu0
        %v1118 = vadd.f32 %v689, %v1117
        %v1119 = vpop.f32.mrb[0].mxu0
        %v1120 = vpop.f32.mrb[0].mxu0
        %1121 = vdwg.mxu0
        %1122 = vmatprep.subr.bf16.mxu0 %v986
        %1123 = vmatpush1.bf16.msra.mxu0 %v985
        %1124 = vmatprep.subr.bf16.mxu0 %v989
        %1125 = vmatpush1.bf16.msra.mxu0 %v988
        %1126 = vmatprep.subr.bf16.mxu0 %v992
        %1127 = vmatpush1.bf16.msra.mxu0 %v991
        %1128 = vmatprep.subr.bf16.mxu0 %v995
        %1129 = vmatpush1.bf16.msra.mxu0 %v994
        %1130 = vmatprep.subr.bf16.mxu0 %v998
        %1131 = vmatpush1.bf16.msra.mxu0 %v997
        %1132 = vmatprep.subr.bf16.mxu0 %v1001
        %1133 = vmatpush1.bf16.msra.mxu0 %v1000
        %1134 = vmatprep.subr.bf16.mxu0 %v1004
        %1135 = vmatpush1.bf16.msra.mxu0 %v1003
        %1136 = vmatprep.subr.bf16.mxu0 %v1007
        %1137 = vmatpush1.bf16.msra.mxu0 %v1006
        %1138 = vmatprep.subr.bf16.mxu0 0
        %1139 = vmatpush1.bf16.msra.mxu0 0
        %1140 = vmatprep.subr.bf16.mxu0 0
        %1141 = vmatpush1.bf16.msra.mxu0 0
        %1142 = vmatprep.subr.bf16.mxu0 0
        %1143 = vmatpush1.bf16.msra.mxu0 0
        %1144 = vmatprep.subr.bf16.mxu0 0
        %1145 = vmatpush1.bf16.msra.mxu0 0
        %1146 = vmatprep.subr.bf16.mxu0 0
        %1147 = vmatpush1.bf16.msra.mxu0 0
        %1148 = vmatprep.subr.bf16.mxu0 0
        %1149 = vmatpush1.bf16.msra.mxu0 0
        %1150 = vmatprep.subr.bf16.mxu0 0
        %1151 = vmatpush1.bf16.msra.mxu0 0
        %1152 = vmatprep.subr.bf16.mxu0 0
        %1153 = vmatpush1.bf16.msra.mxu0 0
        %1154 = vmatprep.mubr.bf16.mxu0 0
        %1155 = vmatmul.mubr.bf16.gmra.mrb[0].mxu0 %v583
        %v1156 = vpop.f32.mrb[0].mxu0
        %v1157 = vadd.f32 %v1116, %v1156
        %v1158 = vpop.f32.mrb[0].mxu0
        %v1159 = vadd.f32 %v1118, %v1158
        %v1160 = vpop.f32.mrb[0].mxu0
        %v1161 = vpop.f32.mrb[0].mxu0
        %1162 = vdwg.mxu0
        %1163 = vmatprep.subr.bf16.mxu0 0
        %1164 = vmatpush1.bf16.msra.mxu0 %v939
        %1165 = vmatprep.subr.bf16.mxu0 0
        %1166 = vmatpush1.bf16.msra.mxu0 %v942
        %1167 = vmatprep.subr.bf16.mxu0 0
        %1168 = vmatpush1.bf16.msra.mxu0 %v945
        %1169 = vmatprep.subr.bf16.mxu0 0
        %1170 = vmatpush1.bf16.msra.mxu0 %v948
        %1171 = vmatprep.subr.bf16.mxu0 0
        %1172 = vmatpush1.bf16.msra.mxu0 %v951
        %1173 = vmatprep.subr.bf16.mxu0 0
        %1174 = vmatpush1.bf16.msra.mxu0 %v954
        %1175 = vmatprep.subr.bf16.mxu0 0
        %1176 = vmatpush1.bf16.msra.mxu0 %v957
        %1177 = vmatprep.subr.bf16.mxu0 0
        %1178 = vmatpush1.bf16.msra.mxu0 %v960
        %1179 = vmatprep.subr.bf16.mxu0 0
        %1180 = vmatpush1.bf16.msra.mxu0 %v963
        %1181 = vmatprep.subr.bf16.mxu0 0
        %1182 = vmatpush1.bf16.msra.mxu0 %v966
        %1183 = vmatprep.subr.bf16.mxu0 0
        %1184 = vmatpush1.bf16.msra.mxu0 %v969
        %1185 = vmatprep.subr.bf16.mxu0 0
        %1186 = vmatpush1.bf16.msra.mxu0 %v972
        %1187 = vmatprep.subr.bf16.mxu0 0
        %1188 = vmatpush1.bf16.msra.mxu0 %v975
        %1189 = vmatprep.subr.bf16.mxu0 0
        %1190 = vmatpush1.bf16.msra.mxu0 %v978
        %1191 = vmatprep.subr.bf16.mxu0 0
        %1192 = vmatpush1.bf16.msra.mxu0 %v981
        %1193 = vmatprep.subr.bf16.mxu0 0
        %1194 = vmatpush1.bf16.msra.mxu0 %v984
        %1195 = vmatprep.mubr.bf16.mxu0 %v582
        %1196 = vmatmul.mubr.bf16.gmra.mrb[0].mxu0 %v581
        %v1197 = vpop.f32.mrb[0].mxu0
        %v1198 = vadd.f32 %v693, %v1197
        %v1199 = vpop.f32.mrb[0].mxu0
        %v1200 = vpop.f32.mrb[0].mxu0
        %v1201 = vpop.f32.mrb[0].mxu0
        %1202 = vdwg.mxu0
        %1203 = vmatprep.subr.bf16.mxu0 0
        %1204 = vmatpush1.bf16.msra.mxu0 %v987
        %1205 = vmatprep.subr.bf16.mxu0 0
        %1206 = vmatpush1.bf16.msra.mxu0 %v990
        %1207 = vmatprep.subr.bf16.mxu0 0
        %1208 = vmatpush1.bf16.msra.mxu0 %v993
        %1209 = vmatprep.subr.bf16.mxu0 0
        %1210 = vmatpush1.bf16.msra.mxu0 %v996
        %1211 = vmatprep.subr.bf16.mxu0 0
        %1212 = vmatpush1.bf16.msra.mxu0 %v999
        %1213 = vmatprep.subr.bf16.mxu0 0
        %1214 = vmatpush1.bf16.msra.mxu0 %v1002
        %1215 = vmatprep.subr.bf16.mxu0 0
        %1216 = vmatpush1.bf16.msra.mxu0 %v1005
        %1217 = vmatprep.subr.bf16.mxu0 0
        %1218 = vmatpush1.bf16.msra.mxu0 %v1008
        %1219 = vmatprep.subr.bf16.mxu0 0
        %1220 = vmatpush1.bf16.msra.mxu0 0
        %1221 = vmatprep.subr.bf16.mxu0 0
        %1222 = vmatpush1.bf16.msra.mxu0 0
        %1223 = vmatprep.subr.bf16.mxu0 0
        %1224 = vmatpush1.bf16.msra.mxu0 0
        %1225 = vmatprep.subr.bf16.mxu0 0
        %1226 = vmatpush1.bf16.msra.mxu0 0
        %1227 = vmatprep.subr.bf16.mxu0 0
        %1228 = vmatpush1.bf16.msra.mxu0 0
        %1229 = vmatprep.subr.bf16.mxu0 0
        %1230 = vmatpush1.bf16.msra.mxu0 0
        %1231 = vmatprep.subr.bf16.mxu0 0
        %1232 = vmatpush1.bf16.msra.mxu0 0
        %1233 = vmatprep.subr.bf16.mxu0 0
        %1234 = vmatpush1.bf16.msra.mxu0 0
        %1235 = vmatprep.mubr.bf16.mxu0 0
        %1236 = vmatmul.mubr.bf16.gmra.mrb[0].mxu0 %v583
        %v1237 = vpop.f32.mrb[0].mxu0
        %v1238 = vadd.f32 %v1198, %v1237
        %v1239 = vpop.f32.mrb[0].mxu0
        %v1240 = vpop.f32.mrb[0].mxu0
        %v1241 = vpop.f32.mrb[0].mxu0
        %1242 = vdwg.mxu0
        %v1243 = vmax.f32 %v1157, 0.0
        %v1244 = vmax.f32 %v1159, 0.0
        %v1245 = vmax.f32 %v1238, 0.0
        %v1246 = vld [vmem:[%s429] sm:$0x7]
        %v1247 = vunpack.c.l.bf16 %v1246
        %v1249 = vlaneseq
        %v1250 = vshrl.u32 %v1249, 7
        %v1251 = vsub.s32 0, %v1250
        %v1252 = vrot.slane %v1247, %v1251
        %v1253 = vlaneseq
        %v1254 = vshrl.u32 %v1253, 7
        %v1255 = vsub.s32 2, %v1254
        %v1256 = vrot.slane %v1247, %v1255
        %v1257 = vlaneseq
        %v1258 = vshrl.u32 %v1257, 7
        %v1259 = vsub.s32 4, %v1258
        %v1260 = vrot.slane %v1247, %v1259
        %v1264 = vlaneseq
        %v1265 = vshrl.u32 %v1264, 7
        %v1266 = vsub.s32 0, %v1265
        %v1267 = vrot.slane %v1252, %v1266
        %v1268 = vlaneseq
        %v1269 = vshrl.u32 %v1268, 7
        %v1270 = vsub.s32 0, %v1269
        %v1271 = vrot.slane %v1256, %v1270
        %v1272 = vlaneseq
        %v1273 = vshrl.u32 %v1272, 7
        %v1274 = vsub.s32 0, %v1273
        %v1275 = vrot.slane %v1260, %v1274
        %v1276 = vmul.f32 %v1243, %v1267
        %v1277 = vmul.f32 %v1244, %v1271
        %v1278 = vmul.f32 %v1245, %v1275
        %vm1279 = vcmask 1041408
        %v1280 = vsel %vm1279, %v1276, 0.0
        %v1281 = vsel %vm1279, %v1277, 0.0
        %v1282 = vadd.f32 %v1280, %v1281
        %v1283 = vsel %vm1279, %v1278, 0.0
        %v1284 = vadd.f32 %v1282, %v1283
        %1285 = vadd.xlane.f32.xlu0 %v1284
        %v1286 = vpop.xlane.xlu0 %1285
        %v1287 = vld [vmem:[%s432] sm:$0x1]
        %v1289 = vlaneseq
        %v1290 = vshrl.u32 %v1289, 7
        %v1291 = vsub.s32 0, %v1290
        %v1292 = vrot.slane %v1287, %v1291
        %v1294 = vadd.f32 %v1286, %v1292
        %1296 = vset.pattern.permute.xlu0 0
        %1297 = vperm.xlu0 %1296, %v1294
        %v1298 = vpop.permute.xlu0 %1297
        %1300 = vst [vmem:[%s417] sm:$0x3] %v1298
        %s1301 = sand.u32 %s229, 1
        %s1302 = scalar_lea.sflag [#allocation4], %s1301
        %s1303 = sand.u32 %s229, 1
        %s1304 = smul.addr %s1303, 2
        %s1305 = scalar_lea.vmem [#allocation8], %s1304
        // Predicated region
        $region61: #{tpu_custom_call.1} parent=47 // pred_check
          %p1306 = pneg %p239
        $region62: #{tpu_custom_call.1} parent=47 // pred_check_branch
          %1308 = sbr.rel (%p1306) target = $region64
        $region63: #{tpu_custom_call.1} parent=47 // pred_region
          %s1310 = ssub.s32 32, 32
          %1311 = vsyncadd %s1302, %s1310
          %s1312 = sadd.s32 %s30, %s29
          %s1313 = smul.addr %s1312, 32
          %s1314 = scalar_lea.hbm %s7, %s1313
          %s1316 = sshll.u32 %s1305, 4
          %s1317 = int_to_ptr.vmem [resolvable:$true] %s1316
          %1319 = dma.vmem_to_hbm [thread:$0]  %s1317, 32, %s1314, %s1302
        $region64: #{tpu_custom_call.1} parent=47 // pred_fallthru
          _
      $region48: #{tpu_custom_call.1} parent=5 // pred_fallthru
        _
      %p1320 = scmp.le.s32.totalorder 2, %s20
      // Predicated region
      $region65: #{tpu_custom_call.1} parent=5 // pred_check
        %p1321 = pneg %p1320
      $region66: #{tpu_custom_call.1} parent=5 // pred_check_branch
        %1323 = sbr.rel (%p1321) target = $region68
      $region67: #{tpu_custom_call.1} parent=5 // pred_region
        %s1324 = ssub.s32 %s20, 2
        // Predicated region
        $region69: #{tpu_custom_call.1} parent=67 // pred_check
          %p1325 = pneg %p245
        $region70: #{tpu_custom_call.1} parent=67 // pred_check_branch
          %1327 = sbr.rel (%p1325) target = $region72
        $region71: #{tpu_custom_call.1} parent=67 // pred_region
          %s1328 = sand.u32 %s230, 1
          %s1329 = scalar_lea.sflag [#allocation4], %s1328
          %s1330 = sand.u32 %s230, 1
          %s1331 = smul.addr %s1330, 2
          %s1332 = scalar_lea.vmem [#allocation8], %s1331
          %1333 = dma.done %s1329, 32
        $region72: #{tpu_custom_call.1} parent=67 // pred_fallthru
          _
      $region68: #{tpu_custom_call.1} parent=5 // pred_fallthru
        _
    $region6: #{tpu_custom_call.1} parent=1 // loop_footer
      %s24 = sadd.s32 1, %s20
    $region7: #{tpu_custom_call.1} parent=1 // loop_footer_branch
      %19 = sbr.rel target = $region3
    $region8: #{tpu_custom_call.1} parent=1 // loop_exit
      _
    %1334 = vsyncpa [#allocation3], 1
    %s1335 = scalar_lea.sflag [#allocation3], 1
    %1336 = vsyncpa %s1335, 1
    %1337 = vsyncpa [#allocation6], 1
    %s1338 = scalar_lea.sflag [#allocation6], 1
    %1339 = vsyncpa %s1338, 1
    %1340 = vsyncpa [#allocation4], 1
    %s1341 = scalar_lea.sflag [#allocation4], 1
    %1342 = vsyncpa %s1341, 1

</llo_original>
